<compile_context>
chip_gen: v5e
topology: v5e:2x2
jax: 0.10.0
libtpu: 0.0.40
codegen_flags: <defaults>
</compile_context>

<pallas_src>
import jax
import jax.numpy as jnp
from jax.experimental import pallas as pl
from jax.experimental.pallas import tpu as pltpu


def _round_up(x: int, m: int) -> int:
    return (x + m - 1) // m * m


def basic_block_kernel(x_ref, w1_ref, b1_ref, w2_ref, b2_ref, o_ref):
    x = x_ref[...]                                          # [TB, F]
    # hidden = relu(x @ W1 + b1) -- accumulate in f32 on the MXU
    h = jnp.dot(x, w1_ref[...], preferred_element_type=jnp.float32)
    h = jnp.maximum(h + b1_ref[...], 0.0)                   # [TB, H] f32
    # y = relu((h @ W2 + b2) + x)
    y = jnp.dot(h.astype(w2_ref.dtype), w2_ref[...],
                preferred_element_type=jnp.float32)
    y = y + b2_ref[...] + x.astype(jnp.float32)
    o_ref[...] = jnp.maximum(y, 0.0).astype(o_ref.dtype)


def basic_block(x, w1, b1, w2, b2, *, block_b=1024, compute_dtype=None, out_dtype=None):
    """x: [B, F]; w1: [F, H]; b1: [1, H]; w2: [H, P]; b2: [1, P]; returns [B, P] (P == F)."""
    B, F = x.shape
    H = w1.shape[1]
    P = w2.shape[1]
    assert P == F, "residual add requires predictions == features"

    cdt = x.dtype if compute_dtype is None else jnp.dtype(compute_dtype)
    odt = jnp.float32 if out_dtype is None else jnp.dtype(out_dtype)

    # Batch tile: multiple of the sublane packing (16 for bf16, 8 otherwise), capped by
    # block_b, and chosen so the grid has >= 2 steps when the batch allows (keeps both
    # v7x TensorCores busy under the "parallel" batch axis).
    sub = 16 if cdt == jnp.bfloat16 else 8
    TB = min(block_b, max(sub, _round_up(pl.cdiv(B, 2), sub)))
    TB = _round_up(TB, sub)
    grid = (pl.cdiv(B, TB),)

    # Cost hint for XLA scheduling: real (unpadded) dims, real bytes moved.
    w_item = jnp.dtype(cdt).itemsize
    flops = 2 * B * (F * H + H * P)
    bytes_accessed = (B * F * w_item                    # x stream
                      + B * P * jnp.dtype(odt).itemsize  # output stream
                      + (F * H + H * P) * w_item         # weights (read once)
                      + (H + P) * 4)                     # biases (f32)
    cost = pl.CostEstimate(flops=flops, transcendentals=0,
                           bytes_accessed=bytes_accessed)

    out = pl.pallas_call(
        basic_block_kernel,
        out_shape=jax.ShapeDtypeStruct((B, P), odt),
        grid=grid,
        in_specs=[
            pl.BlockSpec((TB, F), lambda i: (i, 0)),   # x: tiled over batch (full F lanes)
            pl.BlockSpec((F, H), lambda i: (0, 0)),    # W1: VMEM-resident
            pl.BlockSpec((1, H), lambda i: (0, 0)),    # b1: VMEM-resident
            pl.BlockSpec((H, P), lambda i: (0, 0)),    # W2: VMEM-resident
            pl.BlockSpec((1, P), lambda i: (0, 0)),    # b2: VMEM-resident
        ],
        out_specs=pl.BlockSpec((TB, P), lambda i: (i, 0)),
        compiler_params=pltpu.CompilerParams(
            dimension_semantics=("parallel",),
        ),
        cost_estimate=cost,
    )(x.astype(cdt), w1.astype(cdt),
      b1.reshape(1, H).astype(jnp.float32),
      w2.astype(cdt),
      b2.reshape(1, P).astype(jnp.float32))

    return out


if __name__ == "__main__":
    # Small shapes consistent with the module: features == predictions, hidden = 10.
    B, F, H = 256, 32, 10
    key = jax.random.PRNGKey(0)
    kx, k1, k2, k3, k4 = jax.random.split(key, 5)

    x = jax.random.normal(kx, (B, F), dtype=jnp.float32)

    # Deterministic PyTorch-style init: U(-1/sqrt(fan_in), 1/sqrt(fan_in)).
    bound1 = 1.0 / jnp.sqrt(jnp.float32(F))
    bound2 = 1.0 / jnp.sqrt(jnp.float32(H))
    w1 = jax.random.uniform(k1, (F, H), jnp.float32, -bound1, bound1)   # Linear1 weight^T
    b1 = jax.random.uniform(k2, (1, H), jnp.float32, -bound1, bound1)
    w2 = jax.random.uniform(k3, (H, F), jnp.float32, -bound2, bound2)   # Linear2 weight^T
    b2 = jax.random.uniform(k4, (1, F), jnp.float32, -bound2, bound2)

    # f32 path (exact vs reference).
    out = jax.block_until_ready(basic_block(x, w1, b1, w2, b2))

    # Pure-JAX reference check.
    h_ref = jnp.maximum(x @ w1 + b1, 0.0)
    y_ref = jnp.maximum(h_ref @ w2 + b2 + x, 0.0)
    assert jnp.allclose(out, y_ref, atol=1e-5, rtol=1e-5), "f32 mismatch vs JAX reference"

    # bf16 compute path (halves x/weight HBM bytes on all generations); looser tolerance
    # because the residual/hidden streams are quantized to bf16.
    out_bf16 = jax.block_until_ready(
        basic_block(x, w1, b1, w2, b2, compute_dtype=jnp.bfloat16))
    assert jnp.allclose(out_bf16.astype(jnp.float32), y_ref, atol=5e-2, rtol=5e-2), \
        "bf16 mismatch vs JAX reference"

    print("KERNEL_OK")
</pallas_src>

<mosaic_0001>
module attributes {stable_mosaic.version = 11 : i64} {
  func.func @basic_block_kernel(%arg0: i32, %arg1: memref<128x32xf32, #tpu.memory_space<vmem>>, %arg2: memref<32x10xf32, #tpu.memory_space<vmem>>, %arg3: memref<1x10xf32, #tpu.memory_space<vmem>>, %arg4: memref<10x32xf32, #tpu.memory_space<vmem>>, %arg5: memref<1x32xf32, #tpu.memory_space<vmem>>, %arg6: memref<128x32xf32, #tpu.memory_space<vmem>>) attributes {dimension_semantics = [#tpu.dimension_semantics<parallel>], iteration_bounds = array<i64: 2>, scalar_prefetch = 0 : i64, scratch_operands = 0 : i64, tpu.core_type = #tpu.core_type<tc>, window_params = [{transform_indices = @transform_0, window_bounds = array<i64: 128, 32>}, {pipeline_mode = #tpu.pipeline_mode<synchronous>, transform_indices = @transform_1, window_bounds = array<i64: 32, 10>}, {pipeline_mode = #tpu.pipeline_mode<synchronous>, transform_indices = @transform_2, window_bounds = array<i64: 1, 10>}, {pipeline_mode = #tpu.pipeline_mode<synchronous>, transform_indices = @transform_3, window_bounds = array<i64: 10, 32>}, {pipeline_mode = #tpu.pipeline_mode<synchronous>, transform_indices = @transform_4, window_bounds = array<i64: 1, 32>}, {transform_indices = @transform_5, window_bounds = array<i64: 128, 32>}]} {
    %c0 = arith.constant 0 : index
    %c0_0 = arith.constant 0 : index
    %0 = vector.load %arg1[%c0, %c0_0] : memref<128x32xf32, #tpu.memory_space<vmem>>, vector<128x32xf32>
    %c0_1 = arith.constant 0 : index
    %c0_2 = arith.constant 0 : index
    %1 = vector.load %arg2[%c0_1, %c0_2] : memref<32x10xf32, #tpu.memory_space<vmem>>, vector<32x10xf32>
    %cst = arith.constant dense<0.000000e+00> : vector<128x10xf32>
    %2 = tpu.matmul %0, %1, %cst {dimension_numbers = #tpu.dot_dimension_numbers<[1], [0], [0], [1], [0, 0, 1, 1], [], []>} : vector<128x32xf32>, vector<32x10xf32>, vector<128x10xf32> -> vector<128x10xf32>
    %c0_3 = arith.constant 0 : index
    %c0_4 = arith.constant 0 : index
    %3 = vector.load %arg3[%c0_3, %c0_4] : memref<1x10xf32, #tpu.memory_space<vmem>>, vector<1x10xf32>
    %4 = vector.broadcast %3 : vector<1x10xf32> to vector<128x10xf32>
    %5 = arith.addf %2, %4 : vector<128x10xf32>
    %cst_5 = arith.constant 0.000000e+00 : f32
    %6 = vector.broadcast %cst_5 : f32 to vector<128x10xf32>
    %7 = arith.maximumf %5, %6 : vector<128x10xf32>
    %c0_6 = arith.constant 0 : index
    %c0_7 = arith.constant 0 : index
    %8 = vector.load %arg4[%c0_6, %c0_7] : memref<10x32xf32, #tpu.memory_space<vmem>>, vector<10x32xf32>
    %cst_8 = arith.constant dense<0.000000e+00> : vector<128x32xf32>
    %9 = tpu.matmul %7, %8, %cst_8 {dimension_numbers = #tpu.dot_dimension_numbers<[1], [0], [0], [1], [0, 0, 1, 1], [], []>} : vector<128x10xf32>, vector<10x32xf32>, vector<128x32xf32> -> vector<128x32xf32>
    %c0_9 = arith.constant 0 : index
    %c0_10 = arith.constant 0 : index
    %10 = vector.load %arg5[%c0_9, %c0_10] : memref<1x32xf32, #tpu.memory_space<vmem>>, vector<1x32xf32>
    %11 = vector.broadcast %10 : vector<1x32xf32> to vector<128x32xf32>
    %12 = arith.addf %9, %11 : vector<128x32xf32>
    %13 = arith.addf %12, %0 : vector<128x32xf32>
    %cst_11 = arith.constant 0.000000e+00 : f32
    %14 = vector.broadcast %cst_11 : f32 to vector<128x32xf32>
    %15 = arith.maximumf %13, %14 : vector<128x32xf32>
    %c0_12 = arith.constant 0 : index
    %c0_13 = arith.constant 0 : index
    %16 = vector.load %arg6[%c0_12, %c0_13] : memref<128x32xf32, #tpu.memory_space<vmem>>, vector<128x32xf32>
    tpu.vector_store %arg6[%c0_12, %c0_13], %15 {strides = array<i32>} : memref<128x32xf32, #tpu.memory_space<vmem>>, vector<128x32xf32>,
    return
  }
  func.func @transform_0(%arg0: i32) -> (i32, i32) {
    %c0_i32 = arith.constant 0 : i32
    %c0_i32_0 = arith.constant 0 : i32
    return %arg0, %c0_i32 : i32, i32
  }
  func.func @transform_1(%arg0: i32) -> (i32, i32) {
    %c0_i32 = arith.constant 0 : i32
    %c0_i32_0 = arith.constant 0 : i32
    %c0_i32_1 = arith.constant 0 : i32
    return %c0_i32, %c0_i32_0 : i32, i32
  }
  func.func @transform_2(%arg0: i32) -> (i32, i32) {
    %c0_i32 = arith.constant 0 : i32
    %c0_i32_0 = arith.constant 0 : i32
    %c0_i32_1 = arith.constant 0 : i32
    return %c0_i32, %c0_i32_0 : i32, i32
  }
  func.func @transform_3(%arg0: i32) -> (i32, i32) {
    %c0_i32 = arith.constant 0 : i32
    %c0_i32_0 = arith.constant 0 : i32
    %c0_i32_1 = arith.constant 0 : i32
    return %c0_i32, %c0_i32_0 : i32, i32
  }
  func.func @transform_4(%arg0: i32) -> (i32, i32) {
    %c0_i32 = arith.constant 0 : i32
    %c0_i32_0 = arith.constant 0 : i32
    %c0_i32_1 = arith.constant 0 : i32
    return %c0_i32, %c0_i32_0 : i32, i32
  }
  func.func @transform_5(%arg0: i32) -> (i32, i32) {
    %c0_i32 = arith.constant 0 : i32
    %c0_i32_0 = arith.constant 0 : i32
    return %arg0, %c0_i32 : i32, i32
  }
}

</mosaic_0001>

<llo_original>
// kernel: tpu_custom_call.1
$region0: #{tpu_custom_call.1}
  #allocation0 [shape = 'u32[]', space=smem, size = 0x4, offset = 0x4, fixed_abs, tag = 'smem constant byte address 0x4 - core index']
  #allocation1 [shape = 'u32[72,128]{1,0:T(1,128)}', space=vmem, size = 0x9000, scoped, tag = 'internal scratch']
  %s0 = inlined_call_operand.vmem [shape: f32[256,32], index: 0, kind: input, shape index: {}]
  %s1 = inlined_call_operand.vmem [shape: f32[32,10], index: 1, kind: input, shape index: {}]
  %s2 = inlined_call_operand.vmem [shape: f32[1,10], index: 2, kind: input, shape index: {}]
  %s3 = inlined_call_operand.vmem [shape: f32[10,32], index: 3, kind: input, shape index: {}]
  %s4 = inlined_call_operand.vmem [shape: f32[1,32], index: 4, kind: input, shape index: {}]
  %s5 = inlined_call_operand.vmem [shape: f32[256,32], index: 5, kind: output, shape index: {}]
  %s6 = sld [smem:[#allocation0]]
  $region53: #{tpu_custom_call.1} parent=0
    _
  %s8 = ssub.s32 1, %s6
  %s9 = scalar_select 0, %s8, %s6
  loop: start=0, step=1, limit=4
  $region2: #{tpu_custom_call.1} parent=0 // loop_pre_header
    _
  $region3: #{tpu_custom_call.1} parent=0 // loop_header
    %s11 = sphi 0, %s15
    %p12 = scmp.ge.s32.totalorder %s11, 4
    %s21 = sphi 0, %s23
    %s24 = sphi 0, %s21
    %s25 = sphi 0, %s24
    %s41 = sphi 0, %s25
    %s45 = sphi 0, %s45
    %s47 = sphi 0, %s45
    %s48 = sphi 0, %s47
    %s62 = sphi 0, %s48
    %s66 = sphi 0, %s66
    %s68 = sphi 0, %s66
    %s69 = sphi 0, %s68
    %s83 = sphi 0, %s69
    %s87 = sphi 0, %s87
    %s89 = sphi 0, %s87
    %s90 = sphi 0, %s89
    %s104 = sphi 0, %s90
    %s108 = sphi 0, %s108
    %s110 = sphi 0, %s108
    %s111 = sphi 0, %s110
    %s125 = sphi 0, %s111
    %s131 = sphi 0, %s133
    %s134 = sphi 0, %s131
    %s135 = sphi 0, %s134
    %s151 = sphi 0, %s135
  $region4: #{tpu_custom_call.1} parent=0 // loop_header_branch
    %14 = sbr.rel (%p12) target = $region8
  $region5: #{tpu_custom_call.1} parent=0 // loop_body
    %s16 = ssub.s32 %s11, 1
    %s17 = ssub.s32 %s11, 2
    %s18 = sadd.s32 %s11, 1
    %s19 = ssub.s32 %s11, %s18
    %p20 = scmp.eq.s32.totalorder %s19, 0
    %s22 = sadd.s32 %s21, 1
    %s23 = scalar_select %p20, %s21, %s22
    %p26 = pneg %p20
    %p27 = scmp.eq.s32.totalorder %s11, 1
    %p28 = por %p26, %p27
    %p29 = scmp.ne.s32.totalorder %s21, %s24
    %p30 = scmp.eq.s32.totalorder %s11, 0
    %p31 = por %p29, %p30
    %p32 = scmp.ne.s32.totalorder %s21, %s24
    %p33 = scmp.eq.s32.totalorder %s16, 1
    %p34 = por %p32, %p33
    %p35 = scmp.ne.s32.totalorder %s24, %s25
    %p36 = scmp.eq.s32.totalorder %s16, 0
    %p37 = por %p35, %p36
    %p38 = scmp.ne.s32.totalorder %s24, %s25
    %p39 = scmp.eq.s32.totalorder %s17, 1
    %p40 = por %p38, %p39
    %p42 = scmp.ne.s32.totalorder %s25, %s41
    %p43 = scmp.eq.s32.totalorder %s17, 0
    %p44 = por %p42, %p43
    %s46 = sadd.s32 %s45, 1
    %p49 = scmp.eq.s32.totalorder %s11, 1
    %p50 = scmp.ne.s32.totalorder %s45, %s47
    %p51 = scmp.eq.s32.totalorder %s11, 0
    %p52 = por %p50, %p51
    %p53 = scmp.ne.s32.totalorder %s45, %s47
    %p54 = scmp.eq.s32.totalorder %s16, 1
    %p55 = por %p53, %p54
    %p56 = scmp.ne.s32.totalorder %s47, %s48
    %p57 = scmp.eq.s32.totalorder %s16, 0
    %p58 = por %p56, %p57
    %p59 = scmp.ne.s32.totalorder %s47, %s48
    %p60 = scmp.eq.s32.totalorder %s17, 1
    %p61 = por %p59, %p60
    %p63 = scmp.ne.s32.totalorder %s48, %s62
    %p64 = scmp.eq.s32.totalorder %s17, 0
    %p65 = por %p63, %p64
    %s67 = sadd.s32 %s66, 1
    %p70 = scmp.eq.s32.totalorder %s11, 1
    %p71 = scmp.ne.s32.totalorder %s66, %s68
    %p72 = scmp.eq.s32.totalorder %s11, 0
    %p73 = por %p71, %p72
    %p74 = scmp.ne.s32.totalorder %s66, %s68
    %p75 = scmp.eq.s32.totalorder %s16, 1
    %p76 = por %p74, %p75
    %p77 = scmp.ne.s32.totalorder %s68, %s69
    %p78 = scmp.eq.s32.totalorder %s16, 0
    %p79 = por %p77, %p78
    %p80 = scmp.ne.s32.totalorder %s68, %s69
    %p81 = scmp.eq.s32.totalorder %s17, 1
    %p82 = por %p80, %p81
    %p84 = scmp.ne.s32.totalorder %s69, %s83
    %p85 = scmp.eq.s32.totalorder %s17, 0
    %p86 = por %p84, %p85
    %s88 = sadd.s32 %s87, 1
    %p91 = scmp.eq.s32.totalorder %s11, 1
    %p92 = scmp.ne.s32.totalorder %s87, %s89
    %p93 = scmp.eq.s32.totalorder %s11, 0
    %p94 = por %p92, %p93
    %p95 = scmp.ne.s32.totalorder %s87, %s89
    %p96 = scmp.eq.s32.totalorder %s16, 1
    %p97 = por %p95, %p96
    %p98 = scmp.ne.s32.totalorder %s89, %s90
    %p99 = scmp.eq.s32.totalorder %s16, 0
    %p100 = por %p98, %p99
    %p101 = scmp.ne.s32.totalorder %s89, %s90
    %p102 = scmp.eq.s32.totalorder %s17, 1
    %p103 = por %p101, %p102
    %p105 = scmp.ne.s32.totalorder %s90, %s104
    %p106 = scmp.eq.s32.totalorder %s17, 0
    %p107 = por %p105, %p106
    %s109 = sadd.s32 %s108, 1
    %p112 = scmp.eq.s32.totalorder %s11, 1
    %p113 = scmp.ne.s32.totalorder %s108, %s110
    %p114 = scmp.eq.s32.totalorder %s11, 0
    %p115 = por %p113, %p114
    %p116 = scmp.ne.s32.totalorder %s108, %s110
    %p117 = scmp.eq.s32.totalorder %s16, 1
    %p118 = por %p116, %p117
    %p119 = scmp.ne.s32.totalorder %s110, %s111
    %p120 = scmp.eq.s32.totalorder %s16, 0
    %p121 = por %p119, %p120
    %p122 = scmp.ne.s32.totalorder %s110, %s111
    %p123 = scmp.eq.s32.totalorder %s17, 1
    %p124 = por %p122, %p123
    %p126 = scmp.ne.s32.totalorder %s111, %s125
    %p127 = scmp.eq.s32.totalorder %s17, 0
    %p128 = por %p126, %p127
    %s129 = ssub.s32 %s11, %s18
    %p130 = scmp.eq.s32.totalorder %s129, 0
    %s132 = sadd.s32 %s131, 1
    %s133 = scalar_select %p130, %s131, %s132
    %p136 = pneg %p130
    %p137 = scmp.eq.s32.totalorder %s11, 1
    %p138 = por %p136, %p137
    %p139 = scmp.ne.s32.totalorder %s131, %s134
    %p140 = scmp.eq.s32.totalorder %s11, 0
    %p141 = por %p139, %p140
    %p142 = scmp.ne.s32.totalorder %s131, %s134
    %p143 = scmp.eq.s32.totalorder %s16, 1
    %p144 = por %p142, %p143
    %p145 = scmp.ne.s32.totalorder %s134, %s135
    %p146 = scmp.eq.s32.totalorder %s16, 0
    %p147 = por %p145, %p146
    %p148 = scmp.ne.s32.totalorder %s134, %s135
    %p149 = scmp.eq.s32.totalorder %s17, 1
    %p150 = por %p148, %p149
    %p152 = scmp.ne.s32.totalorder %s135, %s151
    %p153 = scmp.eq.s32.totalorder %s17, 0
    %p154 = por %p152, %p153
    %p155 = scmp.le.s32.totalorder 1, %s11
    %p156 = scmp.lt.s32.totalorder %s11, 3
    %p157 = pnand %p155, %p156
    %p158 = pneg %p157
    // Predicated region
    $region9: #{tpu_custom_call.1} parent=5 // pred_check
      _
    $region10: #{tpu_custom_call.1} parent=5 // pred_check_branch
      %160 = sbr.rel (%p157) target = $region12
    $region11: #{tpu_custom_call.1} parent=5 // pred_region
      %s161 = ssub.s32 %s11, 1
      // Predicated region
      $region13: #{tpu_custom_call.1} parent=11 // pred_check
        %p162 = pneg %p58
      $region14: #{tpu_custom_call.1} parent=11 // pred_check_branch
        %164 = sbr.rel (%p162) target = $region16
      $region15: #{tpu_custom_call.1} parent=11 // pred_region
        _
      $region16: #{tpu_custom_call.1} parent=11 // pred_fallthru
        _
      // Predicated region
      $region17: #{tpu_custom_call.1} parent=11 // pred_check
        %p165 = pneg %p79
      $region18: #{tpu_custom_call.1} parent=11 // pred_check_branch
        %167 = sbr.rel (%p165) target = $region20
      $region19: #{tpu_custom_call.1} parent=11 // pred_region
        _
      $region20: #{tpu_custom_call.1} parent=11 // pred_fallthru
        _
      // Predicated region
      $region21: #{tpu_custom_call.1} parent=11 // pred_check
        %p168 = pneg %p100
      $region22: #{tpu_custom_call.1} parent=11 // pred_check_branch
        %170 = sbr.rel (%p168) target = $region24
      $region23: #{tpu_custom_call.1} parent=11 // pred_region
        _
      $region24: #{tpu_custom_call.1} parent=11 // pred_fallthru
        _
      // Predicated region
      $region25: #{tpu_custom_call.1} parent=11 // pred_check
        %p171 = pneg %p121
      $region26: #{tpu_custom_call.1} parent=11 // pred_check_branch
        %173 = sbr.rel (%p171) target = $region28
      $region27: #{tpu_custom_call.1} parent=11 // pred_region
        _
      $region28: #{tpu_custom_call.1} parent=11 // pred_fallthru
        _
    $region12: #{tpu_custom_call.1} parent=5 // pred_fallthru
      _
    %p174 = scmp.lt.s32.totalorder %s11, 2
    // Predicated region
    $region29: #{tpu_custom_call.1} parent=5 // pred_check
      %p175 = pneg %p174
    $region30: #{tpu_custom_call.1} parent=5 // pred_check_branch
      %177 = sbr.rel (%p175) target = $region32
    $region31: #{tpu_custom_call.1} parent=5 // pred_region
      // Predicated region
      $region33: #{tpu_custom_call.1} parent=31 // pred_check
        %p178 = pneg %p31
      $region34: #{tpu_custom_call.1} parent=31 // pred_check_branch
        %180 = sbr.rel (%p178) target = $region36
      $region35: #{tpu_custom_call.1} parent=31 // pred_region
        %s181 = smul.u32 16, %s11
        %p182 = scmp.lt.s32.totalorder %s181, 31
        %s183 = scalar_select %p182, %s181, 31
        %s184 = smul.addr %s183, 8
        %s185 = scalar_lea.vmem %s0, %s184
        %s186 = smul.u32 16, %s11
      $region36: #{tpu_custom_call.1} parent=31 // pred_fallthru
        _
    $region32: #{tpu_custom_call.1} parent=5 // pred_fallthru
      _
    %p187 = scmp.le.s32.totalorder 1, %s11
    %p188 = scmp.lt.s32.totalorder %s11, 3
    %p189 = pnand %p187, %p188
    %p190 = pneg %p189
    // Predicated region
    $region37: #{tpu_custom_call.1} parent=5 // pred_check
      _
    $region38: #{tpu_custom_call.1} parent=5 // pred_check_branch
      %192 = sbr.rel (%p189) target = $region40
    $region39: #{tpu_custom_call.1} parent=5 // pred_region
      %s193 = ssub.s32 %s11, 1
      %s194 = smul.u32 16, %s16
      %p195 = scmp.lt.s32.totalorder %s194, 31
      %s196 = scalar_select %p195, %s194, 31
      %s197 = smul.addr %s196, 8
      %s198 = scalar_lea.vmem %s0, %s197
      %p199 = pneg %p37
      %p200 = pneg %p34
      %p201 = pneg %p58
      %p202 = pneg %p55
      %p203 = pneg %p79
      %p204 = pneg %p76
      %p205 = pneg %p100
      %p206 = pneg %p97
      %p207 = pneg %p121
      %p208 = pneg %p118
      %p209 = pneg %p147
      %p210 = pneg %p144
      %s211 = smul.u32 16, %s16
      %p212 = scmp.lt.s32.totalorder %s211, 31
      %s213 = scalar_select %p212, %s211, 31
      %s214 = smul.addr %s213, 8
      %s215 = scalar_lea.vmem %s5, %s214
      %s216 = smul.u32 16, %s16
      %p217 = scmp.lt.s32.totalorder %s216, 31
      %s218 = scalar_select %p217, %s216, 31
      %s219 = smul.addr %s218, 8
      %s220 = scalar_lea.vmem %s0, %s219
      %s221 = smul.u32 16, %s16
      %s222 = smul.u32 16, %s16
      %p223 = scmp.lt.s32.totalorder %s222, 31
      %s224 = scalar_select %p223, %s222, 31
      %s225 = smul.addr %s224, 8
      %s226 = scalar_lea.vmem %s5, %s225
      %s227 = smul.u32 16, %s16
      %v228 = vld [vmem:[%s220] sm:$0xff]
      %v229 = vld [vmem:[%s220 + $0x8] sm:$0xff]
      %v230 = vld [vmem:[%s220 + $0x10] sm:$0xff]
      %v231 = vld [vmem:[%s220 + $0x18] sm:$0xff]
      %v232 = vld [vmem:[%s220 + $0x20] sm:$0xff]
      %v233 = vld [vmem:[%s220 + $0x28] sm:$0xff]
      %v234 = vld [vmem:[%s220 + $0x30] sm:$0xff]
      %v235 = vld [vmem:[%s220 + $0x38] sm:$0xff]
      %v236 = vld [vmem:[%s220 + $0x40] sm:$0xff]
      %v237 = vld [vmem:[%s220 + $0x48] sm:$0xff]
      %v238 = vld [vmem:[%s220 + $0x50] sm:$0xff]
      %v239 = vld [vmem:[%s220 + $0x58] sm:$0xff]
      %v240 = vld [vmem:[%s220 + $0x60] sm:$0xff]
      %v241 = vld [vmem:[%s220 + $0x68] sm:$0xff]
      %v242 = vld [vmem:[%s220 + $0x70] sm:$0xff]
      %v243 = vld [vmem:[%s220 + $0x78] sm:$0xff]
      %v244 = vld [vmem:[%s1] sm:$0xff]
      %v245 = vld [vmem:[%s1 + $0x8] sm:$0xff]
      %v246 = vld [vmem:[%s1 + $0x10] sm:$0xff]
      %v247 = vld [vmem:[%s1 + $0x18] sm:$0xff]
      %v248 = vld [vmem:[%s2] sm:$0x1]
      %v250 = vperm.slane %v248, 0
      %vm252 = vcmask 261120
      %v254 = vsel %vm252, %v228, 0
      %v257 = vsel %vm252, %v229, 0
      %v260 = vsel %vm252, %v230, 0
      %v263 = vsel %vm252, %v231, 0
      %v266 = vsel %vm252, %v232, 0
      %v269 = vsel %vm252, %v233, 0
      %v272 = vsel %vm252, %v234, 0
      %v275 = vsel %vm252, %v235, 0
      %v278 = vsel %vm252, %v236, 0
      %v281 = vsel %vm252, %v237, 0
      %v284 = vsel %vm252, %v238, 0
      %v287 = vsel %vm252, %v239, 0
      %v290 = vsel %vm252, %v240, 0
      %v293 = vsel %vm252, %v241, 0
      %v296 = vsel %vm252, %v242, 0
      %v299 = vsel %vm252, %v243, 0
      %301 = vmatpush.msra.mxu0 0.0
      %302 = vmatpush.msra.mxu0 0.0
      %303 = vmatpush.msra.mxu0 0.0
      %304 = vmatpush.msra.mxu0 0.0
      %305 = vmatpush.msra.mxu0 0.0
      %306 = vmatpush.msra.mxu0 0.0
      %307 = vmatpush.msra.mxu0 0.0
      %308 = vmatpush.msra.mxu0 0.0
      %309 = vmatpush.msra.mxu0 0.0
      %310 = vmatpush.msra.mxu0 0.0
      %311 = vmatpush.msra.mxu0 0.0
      %312 = vmatpush.msra.mxu0 0.0
      %313 = vmatpush.msra.mxu0 %v247
      %314 = vmatpush.msra.mxu0 %v246
      %315 = vmatpush.msra.mxu0 %v245
      %316 = vmatpush.msra.mxu0 %v244
      %317 = vmatmul.f32.gmra.mxu0 %v254
      %v318 = vpop.f32.mrf.mxu0
      %v319 = vadd.f32 %v250, %v318
      %320 = vmatmul.f32.gmra.mxu0 %v257
      %v321 = vpop.f32.mrf.mxu0
      %v322 = vadd.f32 %v250, %v321
      %323 = vmatmul.f32.gmra.mxu0 %v260
      %v324 = vpop.f32.mrf.mxu0
      %v325 = vadd.f32 %v250, %v324
      %326 = vmatmul.f32.gmra.mxu0 %v263
      %v327 = vpop.f32.mrf.mxu0
      %v328 = vadd.f32 %v250, %v327
      %329 = vmatmul.f32.gmra.mxu0 %v266
      %v330 = vpop.f32.mrf.mxu0
      %v331 = vadd.f32 %v250, %v330
      %332 = vmatmul.f32.gmra.mxu0 %v269
      %v333 = vpop.f32.mrf.mxu0
      %v334 = vadd.f32 %v250, %v333
      %335 = vmatmul.f32.gmra.mxu0 %v272
      %v336 = vpop.f32.mrf.mxu0
      %v337 = vadd.f32 %v250, %v336
      %338 = vmatmul.f32.gmra.mxu0 %v275
      %v339 = vpop.f32.mrf.mxu0
      %v340 = vadd.f32 %v250, %v339
      %341 = vmatmul.f32.gmra.mxu0 %v278
      %v342 = vpop.f32.mrf.mxu0
      %v343 = vadd.f32 %v250, %v342
      %344 = vmatmul.f32.gmra.mxu0 %v281
      %v345 = vpop.f32.mrf.mxu0
      %v346 = vadd.f32 %v250, %v345
      %347 = vmatmul.f32.gmra.mxu0 %v284
      %v348 = vpop.f32.mrf.mxu0
      %v349 = vadd.f32 %v250, %v348
      %350 = vmatmul.f32.gmra.mxu0 %v287
      %v351 = vpop.f32.mrf.mxu0
      %v352 = vadd.f32 %v250, %v351
      %353 = vmatmul.f32.gmra.mxu0 %v290
      %v354 = vpop.f32.mrf.mxu0
      %v355 = vadd.f32 %v250, %v354
      %356 = vmatmul.f32.gmra.mxu0 %v293
      %v357 = vpop.f32.mrf.mxu0
      %v358 = vadd.f32 %v250, %v357
      %359 = vmatmul.f32.gmra.mxu0 %v296
      %v360 = vpop.f32.mrf.mxu0
      %v361 = vadd.f32 %v250, %v360
      %362 = vmatmul.f32.gmra.mxu0 %v299
      %v363 = vpop.f32.mrf.mxu0
      %v364 = vadd.f32 %v250, %v363
      %365 = vdwg.mxu0
      %v366 = vmax.f32 %v319, 0.0
      %v367 = vmax.f32 %v322, 0.0
      %v368 = vmax.f32 %v325, 0.0
      %v369 = vmax.f32 %v328, 0.0
      %v370 = vmax.f32 %v331, 0.0
      %v371 = vmax.f32 %v334, 0.0
      %v372 = vmax.f32 %v337, 0.0
      %v373 = vmax.f32 %v340, 0.0
      %v374 = vmax.f32 %v343, 0.0
      %v375 = vmax.f32 %v346, 0.0
      %v376 = vmax.f32 %v349, 0.0
      %v377 = vmax.f32 %v352, 0.0
      %v378 = vmax.f32 %v355, 0.0
      %v379 = vmax.f32 %v358, 0.0
      %v380 = vmax.f32 %v361, 0.0
      %v381 = vmax.f32 %v364, 0.0
      %v382 = vld [vmem:[%s3] sm:$0xff]
      %v383 = vld [vmem:[%s3 + $0x8] sm:$0x3]
      %v384 = vld [vmem:[%s4] sm:$0x1]
      %v386 = vperm.slane %v384, 0
      %vm388 = vcmask 80896
      %v390 = vsel %vm388, %v366, 0
      %v393 = vsel %vm388, %v367, 0
      %v396 = vsel %vm388, %v368, 0
      %v399 = vsel %vm388, %v369, 0
      %v402 = vsel %vm388, %v370, 0
      %v405 = vsel %vm388, %v371, 0
      %v408 = vsel %vm388, %v372, 0
      %v411 = vsel %vm388, %v373, 0
      %v414 = vsel %vm388, %v374, 0
      %v417 = vsel %vm388, %v375, 0
      %v420 = vsel %vm388, %v376, 0
      %v423 = vsel %vm388, %v377, 0
      %v426 = vsel %vm388, %v378, 0
      %v429 = vsel %vm388, %v379, 0
      %v432 = vsel %vm388, %v380, 0
      %v435 = vsel %vm388, %v381, 0
      %vm437 = vcmask 1041408
      %v439 = vsel %vm437, %v383, 0
      %441 = vmatpush.msra.mxu0 0.0
      %442 = vmatpush.msra.mxu0 0.0
      %443 = vmatpush.msra.mxu0 0.0
      %444 = vmatpush.msra.mxu0 0.0
      %445 = vmatpush.msra.mxu0 0.0
      %446 = vmatpush.msra.mxu0 0.0
      %447 = vmatpush.msra.mxu0 0.0
      %448 = vmatpush.msra.mxu0 0.0
      %449 = vmatpush.msra.mxu0 0.0
      %450 = vmatpush.msra.mxu0 0.0
      %451 = vmatpush.msra.mxu0 0.0
      %452 = vmatpush.msra.mxu0 0.0
      %453 = vmatpush.msra.mxu0 0.0
      %454 = vmatpush.msra.mxu0 0.0
      %455 = vmatpush.msra.mxu0 %v439
      %456 = vmatpush.msra.mxu0 %v382
      %457 = vmatmul.f32.gmra.mxu0 %v390
      %v458 = vpop.f32.mrf.mxu0
      %v459 = vadd.f32 %v386, %v458
      %460 = vmatmul.f32.gmra.mxu0 %v393
      %v461 = vpop.f32.mrf.mxu0
      %v462 = vadd.f32 %v386, %v461
      %463 = vmatmul.f32.gmra.mxu0 %v396
      %v464 = vpop.f32.mrf.mxu0
      %v465 = vadd.f32 %v386, %v464
      %466 = vmatmul.f32.gmra.mxu0 %v399
      %v467 = vpop.f32.mrf.mxu0
      %v468 = vadd.f32 %v386, %v467
      %469 = vmatmul.f32.gmra.mxu0 %v402
      %v470 = vpop.f32.mrf.mxu0
      %v471 = vadd.f32 %v386, %v470
      %472 = vmatmul.f32.gmra.mxu0 %v405
      %v473 = vpop.f32.mrf.mxu0
      %v474 = vadd.f32 %v386, %v473
      %475 = vmatmul.f32.gmra.mxu0 %v408
      %v476 = vpop.f32.mrf.mxu0
      %v477 = vadd.f32 %v386, %v476
      %478 = vmatmul.f32.gmra.mxu0 %v411
      %v479 = vpop.f32.mrf.mxu0
      %v480 = vadd.f32 %v386, %v479
      %481 = vmatmul.f32.gmra.mxu0 %v414
      %v482 = vpop.f32.mrf.mxu0
      %v483 = vadd.f32 %v386, %v482
      %484 = vmatmul.f32.gmra.mxu0 %v417
      %v485 = vpop.f32.mrf.mxu0
      %v486 = vadd.f32 %v386, %v485
      %487 = vmatmul.f32.gmra.mxu0 %v420
      %v488 = vpop.f32.mrf.mxu0
      %v489 = vadd.f32 %v386, %v488
      %490 = vmatmul.f32.gmra.mxu0 %v423
      %v491 = vpop.f32.mrf.mxu0
      %v492 = vadd.f32 %v386, %v491
      %493 = vmatmul.f32.gmra.mxu0 %v426
      %v494 = vpop.f32.mrf.mxu0
      %v495 = vadd.f32 %v386, %v494
      %496 = vmatmul.f32.gmra.mxu0 %v429
      %v497 = vpop.f32.mrf.mxu0
      %v498 = vadd.f32 %v386, %v497
      %499 = vmatmul.f32.gmra.mxu0 %v432
      %v500 = vpop.f32.mrf.mxu0
      %v501 = vadd.f32 %v386, %v500
      %502 = vmatmul.f32.gmra.mxu0 %v435
      %v503 = vpop.f32.mrf.mxu0
      %v504 = vadd.f32 %v386, %v503
      %505 = vdwg.mxu0
      %v506 = vadd.f32 %v459, %v228
      %v507 = vadd.f32 %v462, %v229
      %v508 = vadd.f32 %v465, %v230
      %v509 = vadd.f32 %v468, %v231
      %v510 = vadd.f32 %v471, %v232
      %v511 = vadd.f32 %v474, %v233
      %v512 = vadd.f32 %v477, %v234
      %v513 = vadd.f32 %v480, %v235
      %v514 = vadd.f32 %v483, %v236
      %v515 = vadd.f32 %v486, %v237
      %v516 = vadd.f32 %v489, %v238
      %v517 = vadd.f32 %v492, %v239
      %v518 = vadd.f32 %v495, %v240
      %v519 = vadd.f32 %v498, %v241
      %v520 = vadd.f32 %v501, %v242
      %v521 = vadd.f32 %v504, %v243
      %v522 = vmax.f32 %v506, 0.0
      %v523 = vmax.f32 %v507, 0.0
      %v524 = vmax.f32 %v508, 0.0
      %v525 = vmax.f32 %v509, 0.0
      %v526 = vmax.f32 %v510, 0.0
      %v527 = vmax.f32 %v511, 0.0
      %v528 = vmax.f32 %v512, 0.0
      %v529 = vmax.f32 %v513, 0.0
      %v530 = vmax.f32 %v514, 0.0
      %v531 = vmax.f32 %v515, 0.0
      %v532 = vmax.f32 %v516, 0.0
      %v533 = vmax.f32 %v517, 0.0
      %v534 = vmax.f32 %v518, 0.0
      %v535 = vmax.f32 %v519, 0.0
      %v536 = vmax.f32 %v520, 0.0
      %v537 = vmax.f32 %v521, 0.0
      %538 = vst.msk [vmem:[%s226] sm:$0xff] %vm252, %v522
      %539 = vst.msk [vmem:[%s226 + $0x8] sm:$0xff] %vm252, %v523
      %540 = vst.msk [vmem:[%s226 + $0x10] sm:$0xff] %vm252, %v524
      %541 = vst.msk [vmem:[%s226 + $0x18] sm:$0xff] %vm252, %v525
      %542 = vst.msk [vmem:[%s226 + $0x20] sm:$0xff] %vm252, %v526
      %543 = vst.msk [vmem:[%s226 + $0x28] sm:$0xff] %vm252, %v527
      %544 = vst.msk [vmem:[%s226 + $0x30] sm:$0xff] %vm252, %v528
      %545 = vst.msk [vmem:[%s226 + $0x38] sm:$0xff] %vm252, %v529
      %546 = vst.msk [vmem:[%s226 + $0x40] sm:$0xff] %vm252, %v530
      %547 = vst.msk [vmem:[%s226 + $0x48] sm:$0xff] %vm252, %v531
      %548 = vst.msk [vmem:[%s226 + $0x50] sm:$0xff] %vm252, %v532
      %549 = vst.msk [vmem:[%s226 + $0x58] sm:$0xff] %vm252, %v533
      %550 = vst.msk [vmem:[%s226 + $0x60] sm:$0xff] %vm252, %v534
      %551 = vst.msk [vmem:[%s226 + $0x68] sm:$0xff] %vm252, %v535
      %552 = vst.msk [vmem:[%s226 + $0x70] sm:$0xff] %vm252, %v536
      %553 = vst.msk [vmem:[%s226 + $0x78] sm:$0xff] %vm252, %v537
      %s554 = smul.u32 16, %s16
      %p555 = scmp.lt.s32.totalorder %s554, 31
      %s556 = scalar_select %p555, %s554, 31
      %s557 = smul.addr %s556, 8
      %s558 = scalar_lea.vmem %s5, %s557
      // Predicated region
      $region41: #{tpu_custom_call.1} parent=39 // pred_check
        %p559 = pneg %p144
      $region42: #{tpu_custom_call.1} parent=39 // pred_check_branch
        %561 = sbr.rel (%p559) target = $region44
      $region43: #{tpu_custom_call.1} parent=39 // pred_region
        %s562 = smul.u32 16, %s16
      $region44: #{tpu_custom_call.1} parent=39 // pred_fallthru
        _
    $region40: #{tpu_custom_call.1} parent=5 // pred_fallthru
      _
    %p563 = scmp.le.s32.totalorder 2, %s11
    // Predicated region
    $region45: #{tpu_custom_call.1} parent=5 // pred_check
      %p564 = pneg %p563
    $region46: #{tpu_custom_call.1} parent=5 // pred_check_branch
      %566 = sbr.rel (%p564) target = $region48
    $region47: #{tpu_custom_call.1} parent=5 // pred_region
      %s567 = ssub.s32 %s11, 2
      // Predicated region
      $region49: #{tpu_custom_call.1} parent=47 // pred_check
        %p568 = pneg %p150
      $region50: #{tpu_custom_call.1} parent=47 // pred_check_branch
        %570 = sbr.rel (%p568) target = $region52
      $region51: #{tpu_custom_call.1} parent=47 // pred_region
        %s571 = smul.u32 16, %s17
        %p572 = scmp.lt.s32.totalorder %s571, 31
        %s573 = scalar_select %p572, %s571, 31
        %s574 = smul.addr %s573, 8
        %s575 = scalar_lea.vmem %s5, %s574
      $region52: #{tpu_custom_call.1} parent=47 // pred_fallthru
        _
    $region48: #{tpu_custom_call.1} parent=5 // pred_fallthru
      _
  $region6: #{tpu_custom_call.1} parent=0 // loop_footer
    %s15 = sadd.s32 1, %s11
  $region7: #{tpu_custom_call.1} parent=0 // loop_footer_branch
    %10 = sbr.rel target = $region3
  $region8: #{tpu_custom_call.1} parent=0 // loop_exit
    _

</llo_original>
